<compile_context>
chip_gen: v7x
topology: tpu7x:2x2x1
jax: 0.10.0
libtpu: 0.0.40
codegen_flags: <defaults>
</compile_context>

<pallas_src>
import math

import jax
import jax.numpy as jnp
from jax.experimental import pallas as pl
from jax.experimental.pallas import tpu as pltpu


def _round_up(x, m):
    return (x + m - 1) // m * m


def _choose_tiles(n, c, tile_n, tile_c):
    """Pick (8,128)-aligned tiles minimizing padded HBM traffic + per-step
    overhead under a simple roofline model. The grid always divides the padded
    array exactly (no reliance on partial edge-block behavior)."""
    n8 = _round_up(n, 8)
    c128 = _round_up(c, 128)
    tn_hi = min(max(8, (int(tile_n) // 8) * 8), n8)
    tc_hi = min(max(128, (int(tile_c) // 128) * 128), c128)
    BW = 1.2e12            # ~HBM bytes/s per TensorCore (order of magnitude)
    STEP = 0.35e-6         # measured per-grid-step pipeline overhead
    TILE_CAP = 16 << 20    # single-buffer cap -> double-buffered stays <32 MiB
    best = None
    for tn in range(8, tn_hi + 1, 8):
        n_pad = _round_up(n, tn)
        for tc in range(128, tc_hi + 1, 128):
            if tn * tc * 4 > TILE_CAP:
                continue
            c_pad = _round_up(c, tc)
            steps = (n_pad // tn) * (c_pad // tc)
            t = n_pad * c_pad * 4.0 / BW + steps * STEP
            key = (t, -(tn * tc))
            if best is None or key < best[0]:
                best = (key, tn, tc)
    _, tn, tc = best
    return tn, tc


def _make_arcface_kernel(s: float, m: float, c_actual: int, tile_c: int):
    s = float(s)
    cos_m = float(math.cos(m))
    sin_m = float(math.sin(m))
    eps = 1e-7
    needs_col_mask = (c_actual % tile_c) != 0

    def kernel(logits_ref, labels_ref, loss_ref, m_sc, l_sc, picked_sc):
        k = pl.program_id(1)
        nk = pl.num_programs(1)

        @pl.when(k == 0)
        def _init():
            m_sc[...] = jnp.full_like(m_sc, -jnp.inf)
            l_sc[...] = jnp.zeros_like(l_sc)
            picked_sc[...] = jnp.zeros_like(picked_sc)

        x = logits_ref[...]                     # (TN, TC) f32
        labels = labels_ref[...]                # (TN, 1)  i32
        tn, tc = x.shape

        # torch.clamp(logits, -1+1e-7, 1-1e-7)
        x = jnp.clip(x, -1.0 + eps, 1.0 - eps)

        # one-hot of the label restricted to this class tile, built from a
        # *local* column iota vs (label - col_lo): saves a per-element add.
        col_lo = k * tc
        lbl_local = labels - col_lo                                   # (TN, 1)
        col_local = jax.lax.broadcasted_iota(jnp.int32, (tn, tc), 1)  # (TN, TC)
        one_hot = col_local == lbl_local                              # (TN, TC)

        # x at the label column (0 if the label is not in this tile)
        picked_x = jnp.sum(jnp.where(one_hot, x, 0.0), axis=1, keepdims=True)
        # cheap (TN,1) "label is inside this tile" check (no full N*C reduce)
        has_label = ((lbl_local >= 0) & (lbl_local < tc)).astype(jnp.float32)
        # cos(theta + m) computed only on the picked value
        target = (picked_x * cos_m
                  - jnp.sqrt(jnp.maximum(1.0 - picked_x * picked_x, 0.0)) * sin_m)
        s_target = s * target                                         # (TN, 1)

        # scaled logits with the label column replaced by s*target (1 mul + 1 sel)
        out = jnp.where(one_hot, s_target, s * x)
        if needs_col_mask:
            # padded class columns must not contribute to the softmax
            out = jnp.where(col_local < (c_actual - col_lo), out, -1e30)

        # online logsumexp across class tiles
        m_prev = m_sc[...]
        m_new = jnp.maximum(m_prev, jnp.max(out, axis=1, keepdims=True))
        alpha = jnp.exp(m_prev - m_new)
        l_sc[...] = alpha * l_sc[...] + jnp.sum(jnp.exp(out - m_new), axis=1,
                                                keepdims=True)
        m_sc[...] = m_new
        picked_sc[...] = picked_sc[...] + has_label * s_target

        @pl.when(k == nk - 1)
        def _finalize():
            # per-row CE loss: logsumexp(out) - out[label]
            loss_ref[...] = (m_sc[...] + jnp.log(l_sc[...])) - picked_sc[...]

    return kernel


def arcface_loss_pallas(logits, labels, s=30.0, m=0.5, tile_n=256, tile_c=4096):
    """logits: (N, C) cosine sims; labels: (N,) int. Returns scalar f32 loss."""
    n, c = logits.shape
    logits = logits.astype(jnp.float32)
    labels2d = labels.astype(jnp.int32).reshape(n, 1)

    tn, tc = _choose_tiles(n, c, tile_n, tile_c)
    n_pad = _round_up(n, tn)
    c_pad = _round_up(c, tc)

    if n_pad != n or c_pad != c:
        # TODO(synk): this pad is a full HBM copy for ragged shapes; removing it
        # would require relying on partial edge-block handling in the pipeline.
        logits = jnp.pad(logits, ((0, n_pad - n), (0, c_pad - c)))
    if n_pad != n:
        # padding rows get label -1 -> never match any class column
        labels2d = jnp.pad(labels2d, ((0, n_pad - n), (0, 0)), constant_values=-1)

    grid = (n_pad // tn, c_pad // tc)
    kernel = _make_arcface_kernel(s, m, c, tc)

    # VMEM budget: double-buffered logits tile dominates; keep headroom, cap
    # below v7x's 64 MiB physical VMEM.
    vmem_limit = int(min(64 << 20, max(16 << 20, 2 * tn * tc * 4 + (4 << 20))))

    cost = pl.CostEstimate(
        flops=int(10 * n_pad * c_pad),
        transcendentals=int(n_pad * c_pad),
        bytes_accessed=int(n_pad * c_pad * 4 + 2 * n_pad * 4),
    )

    per_row = pl.pallas_call(
        kernel,
        out_shape=jax.ShapeDtypeStruct((n_pad, 1), jnp.float32),
        grid_spec=pltpu.PrefetchScalarGridSpec(
            num_scalar_prefetch=0,
            grid=grid,
            in_specs=[
                pl.BlockSpec((tn, tc), lambda i, k: (i, k)),
                pl.BlockSpec((tn, 1), lambda i, k: (i, 0)),
            ],
            out_specs=pl.BlockSpec((tn, 1), lambda i, k: (i, 0)),
            scratch_shapes=[
                pltpu.VMEM((tn, 1), jnp.float32),   # running max
                pltpu.VMEM((tn, 1), jnp.float32),   # running sum of exp
                pltpu.VMEM((tn, 1), jnp.float32),   # picked (label) logit
            ],
        ),
        compiler_params=pltpu.CompilerParams(
            dimension_semantics=("parallel", "arbitrary"),
            vmem_limit_bytes=vmem_limit,
        ),
        cost_estimate=cost,
    )(logits, labels2d)

    # drop padding rows; mean over the true batch size
    return jnp.mean(per_row[:n, 0])


def arcface_loss_ref(logits, labels, s=30.0, m=0.5):
    """Pure-JAX reference mirroring the PyTorch module."""
    x = jnp.clip(logits.astype(jnp.float32), -1.0 + 1e-7, 1.0 - 1e-7)
    theta = jnp.arccos(x)
    target = jnp.cos(theta + m)
    one_hot = jax.nn.one_hot(labels, x.shape[1], dtype=x.dtype)
    out = (one_hot * target + (1.0 - one_hot) * x) * s
    logp = jax.nn.log_softmax(out, axis=1)
    return -jnp.mean(jnp.sum(one_hot * logp, axis=1))


if __name__ == "__main__":
    key = jax.random.PRNGKey(0)
    k1, k2, k3, k4, k5, k6 = jax.random.split(key, 6)

    # Case 1: tile-aligned shapes exercising a (2, 2) grid with online logsumexp.
    N1, C1 = 64, 512
    logits1 = jax.random.uniform(k1, (N1, C1), jnp.float32, -1.0, 1.0)
    labels1 = jax.random.randint(k2, (N1,), 0, C1, dtype=jnp.int32)
    loss1 = jax.block_until_ready(
        arcface_loss_pallas(logits1, labels1, s=30.0, m=0.5, tile_n=32, tile_c=256))
    ref1 = arcface_loss_ref(logits1, labels1, s=30.0, m=0.5)
    assert jnp.allclose(loss1, ref1, rtol=1e-4, atol=1e-4), (loss1, ref1)

    # Case 2: ragged shapes exercising row padding + class-column masking.
    N2, C2 = 50, 300
    logits2 = jax.random.uniform(k3, (N2, C2), jnp.float32, -1.0, 1.0)
    labels2 = jax.random.randint(k4, (N2,), 0, C2, dtype=jnp.int32)
    loss2 = jax.block_until_ready(
        arcface_loss_pallas(logits2, labels2, s=30.0, m=0.5, tile_n=32, tile_c=128))
    ref2 = arcface_loss_ref(logits2, labels2, s=30.0, m=0.5)
    assert jnp.allclose(loss2, ref2, rtol=1e-4, atol=1e-4), (loss2, ref2)

    # Case 3: default tiles, whole problem in a single grid step
    # (init and finalize run in the same iteration; ragged C masked).
    N3, C3 = 16, 200
    logits3 = jax.random.uniform(k5, (N3, C3), jnp.float32, -1.0, 1.0)
    labels3 = jax.random.randint(k6, (N3,), 0, C3, dtype=jnp.int32)
    loss3 = jax.block_until_ready(arcface_loss_pallas(logits3, labels3))
    ref3 = arcface_loss_ref(logits3, labels3)
    assert jnp.allclose(loss3, ref3, rtol=1e-4, atol=1e-4), (loss3, ref3)

    print("KERNEL_OK")
</pallas_src>

<mosaic_0001>
module attributes {stable_mosaic.version = 11 : i64} {
  func.func @kernel(%arg0: i32, %arg1: i32, %arg2: memref<32x256xf32, #tpu.memory_space<vmem>>, %arg3: memref<32x1xi32, #tpu.memory_space<vmem>>, %arg4: memref<32x1xf32, #tpu.memory_space<vmem>>, %arg5: memref<32x1xf32, #tpu.memory_space<vmem>>, %arg6: memref<32x1xf32, #tpu.memory_space<vmem>>, %arg7: memref<32x1xf32, #tpu.memory_space<vmem>>) attributes {dimension_semantics = [#tpu.dimension_semantics<parallel>, #tpu.dimension_semantics<arbitrary>], iteration_bounds = array<i64: 2, 2>, scalar_prefetch = 0 : i64, scratch_operands = 3 : i64, tpu.core_type = #tpu.core_type<tc>, window_params = [{transform_indices = @transform_0, window_bounds = array<i64: 32, 256>}, {transform_indices = @transform_1, window_bounds = array<i64: 32, 1>}, {transform_indices = @transform_2, window_bounds = array<i64: 32, 1>}]} {
    %c0_i32 = arith.constant 0 : i32
    %0 = arith.cmpi eq, %arg1, %c0_i32 : i32
    %1 = arith.extui %0 : i1 to i32
    %c0_i32_0 = arith.constant 0 : i32
    %2 = arith.cmpi ne, %1, %c0_i32_0 : i32
    scf.if %2 {
      %cst_30 = arith.constant 0xFF800000 : f32
      %67 = vector.broadcast %cst_30 : f32 to vector<32x1xf32>
      %c0_31 = arith.constant 0 : index
      %c0_32 = arith.constant 0 : index
      %68 = vector.load %arg5[%c0_31, %c0_32] : memref<32x1xf32, #tpu.memory_space<vmem>>, vector<32x1xf32>
      tpu.vector_store %arg5[%c0_31, %c0_32], %67 {strides = array<i32>} : memref<32x1xf32, #tpu.memory_space<vmem>>, vector<32x1xf32>,
      %cst_33 = arith.constant 0.000000e+00 : f32
      %69 = vector.broadcast %cst_33 : f32 to vector<32x1xf32>
      %c0_34 = arith.constant 0 : index
      %c0_35 = arith.constant 0 : index
      %70 = vector.load %arg6[%c0_34, %c0_35] : memref<32x1xf32, #tpu.memory_space<vmem>>, vector<32x1xf32>
      tpu.vector_store %arg6[%c0_34, %c0_35], %69 {strides = array<i32>} : memref<32x1xf32, #tpu.memory_space<vmem>>, vector<32x1xf32>,
      %cst_36 = arith.constant 0.000000e+00 : f32
      %71 = vector.broadcast %cst_36 : f32 to vector<32x1xf32>
      %c0_37 = arith.constant 0 : index
      %c0_38 = arith.constant 0 : index
      %72 = vector.load %arg7[%c0_37, %c0_38] : memref<32x1xf32, #tpu.memory_space<vmem>>, vector<32x1xf32>
      tpu.vector_store %arg7[%c0_37, %c0_38], %71 {strides = array<i32>} : memref<32x1xf32, #tpu.memory_space<vmem>>, vector<32x1xf32>,
    } else {
    }
    %c0 = arith.constant 0 : index
    %c0_1 = arith.constant 0 : index
    %3 = vector.load %arg2[%c0, %c0_1] : memref<32x256xf32, #tpu.memory_space<vmem>>, vector<32x256xf32>
    %c0_2 = arith.constant 0 : index
    %c0_3 = arith.constant 0 : index
    %4 = vector.load %arg3[%c0_2, %c0_3] : memref<32x1xi32, #tpu.memory_space<vmem>>, vector<32x1xi32>
    %cst = arith.constant -0.99999988 : f32
    %cst_4 = arith.constant 0.99999988 : f32
    %5 = vector.broadcast %cst : f32 to vector<32x256xf32>
    %6 = arith.maximumf %5, %3 : vector<32x256xf32>
    %7 = vector.broadcast %cst_4 : f32 to vector<32x256xf32>
    %8 = arith.minimumf %7, %6 : vector<32x256xf32>
    %c256_i32 = arith.constant 256 : i32
    %9 = arith.muli %arg1, %c256_i32 : i32
    %10 = vector.broadcast %9 : i32 to vector<32x1xi32>
    %11 = arith.subi %4, %10 : vector<32x1xi32>
    %12 = tpu.iota {dimensions = array<i32: 1>} : vector<32x256xi32>
    %13 = vector.broadcast %11 : vector<32x1xi32> to vector<32x256xi32>
    %14 = arith.cmpi eq, %12, %13 : vector<32x256xi32>
    %cst_5 = arith.constant 0.000000e+00 : f32
    %15 = vector.broadcast %cst_5 : f32 to vector<32x256xf32>
    %16 = arith.select %14, %8, %15 : vector<32x256xi1>, vector<32x256xf32>
    %cst_6 = arith.constant dense<0.000000e+00> : vector<32xf32>
    %17 = vector.multi_reduction <add>, %16, %cst_6 [1] : vector<32x256xf32> to vector<32xf32>
    %18 = vector.shape_cast %17 : vector<32xf32> to vector<32x1xf32>
    %c0_i32_7 = arith.constant 0 : i32
    %19 = vector.broadcast %c0_i32_7 : i32 to vector<32x1xi32>
    %20 = arith.cmpi sge, %11, %19 : vector<32x1xi32>
    %c256_i32_8 = arith.constant 256 : i32
    %21 = vector.broadcast %c256_i32_8 : i32 to vector<32x1xi32>
    %22 = arith.cmpi slt, %11, %21 : vector<32x1xi32>
    %23 = arith.andi %20, %22 : vector<32x1xi1>
    %24 = arith.extui %23 : vector<32x1xi1> to vector<32x1xi32>
    %25 = arith.sitofp %24 : vector<32x1xi32> to vector<32x1xf32>
    %cst_9 = arith.constant 0.87758255 : f32
    %26 = vector.broadcast %cst_9 : f32 to vector<32x1xf32>
    %27 = arith.mulf %18, %26 : vector<32x1xf32>
    %28 = arith.mulf %18, %18 : vector<32x1xf32>
    %cst_10 = arith.constant 1.000000e+00 : f32
    %29 = vector.broadcast %cst_10 : f32 to vector<32x1xf32>
    %30 = arith.subf %29, %28 : vector<32x1xf32>
    %cst_11 = arith.constant 0.000000e+00 : f32
    %31 = vector.broadcast %cst_11 : f32 to vector<32x1xf32>
    %32 = arith.maximumf %30, %31 : vector<32x1xf32>
    %33 = math.sqrt %32 : vector<32x1xf32>
    %cst_12 = arith.constant 0.47942555 : f32
    %34 = vector.broadcast %cst_12 : f32 to vector<32x1xf32>
    %35 = arith.mulf %33, %34 : vector<32x1xf32>
    %36 = arith.subf %27, %35 : vector<32x1xf32>
    %cst_13 = arith.constant 3.000000e+01 : f32
    %37 = vector.broadcast %cst_13 : f32 to vector<32x1xf32>
    %38 = arith.mulf %37, %36 : vector<32x1xf32>
    %cst_14 = arith.constant 3.000000e+01 : f32
    %39 = vector.broadcast %cst_14 : f32 to vector<32x256xf32>
    %40 = arith.mulf %39, %8 : vector<32x256xf32>
    %41 = vector.shape_cast %38 : vector<32x1xf32> to vector<32x1xf32>
    %42 = vector.broadcast %41 : vector<32x1xf32> to vector<32x256xf32>
    %43 = arith.select %14, %42, %40 : vector<32x256xi1>, vector<32x256xf32>
    %c0_15 = arith.constant 0 : index
    %c0_16 = arith.constant 0 : index
    %44 = vector.load %arg5[%c0_15, %c0_16] : memref<32x1xf32, #tpu.memory_space<vmem>>, vector<32x1xf32>
    %cst_17 = arith.constant dense<0xFF800000> : vector<32xf32>
    %45 = vector.multi_reduction <maximumf>, %43, %cst_17 [1] : vector<32x256xf32> to vector<32xf32>
    %46 = vector.shape_cast %45 : vector<32xf32> to vector<32x1xf32>
    %47 = arith.maximumf %44, %46 : vector<32x1xf32>
    %48 = arith.subf %44, %47 : vector<32x1xf32>
    %49 = math.exp %48 : vector<32x1xf32>
    %c0_18 = arith.constant 0 : index
    %c0_19 = arith.constant 0 : index
    %50 = vector.load %arg6[%c0_18, %c0_19] : memref<32x1xf32, #tpu.memory_space<vmem>>, vector<32x1xf32>
    %51 = arith.mulf %49, %50 : vector<32x1xf32>
    %52 = vector.broadcast %47 : vector<32x1xf32> to vector<32x256xf32>
    %53 = arith.subf %43, %52 : vector<32x256xf32>
    %54 = math.exp %53 : vector<32x256xf32>
    %cst_20 = arith.constant dense<0.000000e+00> : vector<32xf32>
    %55 = vector.multi_reduction <add>, %54, %cst_20 [1] : vector<32x256xf32> to vector<32xf32>
    %56 = vector.shape_cast %55 : vector<32xf32> to vector<32x1xf32>
    %57 = arith.addf %51, %56 : vector<32x1xf32>
    %c0_21 = arith.constant 0 : index
    %c0_22 = arith.constant 0 : index
    %58 = vector.load %arg6[%c0_21, %c0_22] : memref<32x1xf32, #tpu.memory_space<vmem>>, vector<32x1xf32>
    tpu.vector_store %arg6[%c0_21, %c0_22], %57 {strides = array<i32>} : memref<32x1xf32, #tpu.memory_space<vmem>>, vector<32x1xf32>,
    %c0_23 = arith.constant 0 : index
    %c0_24 = arith.constant 0 : index
    %59 = vector.load %arg5[%c0_23, %c0_24] : memref<32x1xf32, #tpu.memory_space<vmem>>, vector<32x1xf32>
    tpu.vector_store %arg5[%c0_23, %c0_24], %47 {strides = array<i32>} : memref<32x1xf32, #tpu.memory_space<vmem>>, vector<32x1xf32>,
    %c0_25 = arith.constant 0 : index
    %c0_26 = arith.constant 0 : index
    %60 = vector.load %arg7[%c0_25, %c0_26] : memref<32x1xf32, #tpu.memory_space<vmem>>, vector<32x1xf32>
    %61 = arith.mulf %25, %38 : vector<32x1xf32>
    %62 = arith.addf %60, %61 : vector<32x1xf32>
    %c0_27 = arith.constant 0 : index
    %c0_28 = arith.constant 0 : index
    %63 = vector.load %arg7[%c0_27, %c0_28] : memref<32x1xf32, #tpu.memory_space<vmem>>, vector<32x1xf32>
    tpu.vector_store %arg7[%c0_27, %c0_28], %62 {strides = array<i32>} : memref<32x1xf32, #tpu.memory_space<vmem>>, vector<32x1xf32>,
    %c1_i32 = arith.constant 1 : i32
    %64 = arith.cmpi eq, %arg1, %c1_i32 : i32
    %65 = arith.extui %64 : i1 to i32
    %c0_i32_29 = arith.constant 0 : i32
    %66 = arith.cmpi ne, %65, %c0_i32_29 : i32
    scf.if %66 {
      %c0_30 = arith.constant 0 : index
      %c0_31 = arith.constant 0 : index
      %67 = vector.load %arg5[%c0_30, %c0_31] : memref<32x1xf32, #tpu.memory_space<vmem>>, vector<32x1xf32>
      %c0_32 = arith.constant 0 : index
      %c0_33 = arith.constant 0 : index
      %68 = vector.load %arg6[%c0_32, %c0_33] : memref<32x1xf32, #tpu.memory_space<vmem>>, vector<32x1xf32>
      %69 = math.log %68 : vector<32x1xf32>
      %70 = arith.addf %67, %69 : vector<32x1xf32>
      %c0_34 = arith.constant 0 : index
      %c0_35 = arith.constant 0 : index
      %71 = vector.load %arg7[%c0_34, %c0_35] : memref<32x1xf32, #tpu.memory_space<vmem>>, vector<32x1xf32>
      %72 = arith.subf %70, %71 : vector<32x1xf32>
      %c0_36 = arith.constant 0 : index
      %c0_37 = arith.constant 0 : index
      %73 = vector.load %arg4[%c0_36, %c0_37] : memref<32x1xf32, #tpu.memory_space<vmem>>, vector<32x1xf32>
      tpu.vector_store %arg4[%c0_36, %c0_37], %72 {strides = array<i32>} : memref<32x1xf32, #tpu.memory_space<vmem>>, vector<32x1xf32>,
    } else {
    }
    return
  }
  func.func @transform_0(%arg0: i32, %arg1: i32) -> (i32, i32) {
    %c0_i32 = arith.constant 0 : i32
    return %arg0, %arg1 : i32, i32
  }
  func.func @transform_1(%arg0: i32, %arg1: i32) -> (i32, i32) {
    %c0_i32 = arith.constant 0 : i32
    %c0_i32_0 = arith.constant 0 : i32
    return %arg0, %c0_i32 : i32, i32
  }
  func.func @transform_2(%arg0: i32, %arg1: i32) -> (i32, i32) {
    %c0_i32 = arith.constant 0 : i32
    %c0_i32_0 = arith.constant 0 : i32
    return %arg0, %c0_i32 : i32, i32
  }
}

</mosaic_0001>

<llo_original>
// kernel: tpu_custom_call.1
$region0: #{tpu_custom_call.1}
  #allocation0 [shape = 'u32[]', space=smem, size = 0x4, offset = 0x4, fixed_abs, tag = 'smem constant byte address 0x4 - core index']
  #allocation1 [shape = 'u32[144,128]{1,0:T(1,128)}', space=vmem, size = 0x12000, scoped, tag = 'internal scratch']
  #allocation2 [shape = 'f32[32,1]{1,0:T(8,128)}', space=vmem, size = 0x4000, scoped, tag = 'scratch operand']
  #allocation3 [shape = 'f32[32,1]{1,0:T(8,128)}', space=vmem, size = 0x4000, scoped, tag = 'scratch operand']
  #allocation4 [shape = 'f32[32,1]{1,0:T(8,128)}', space=vmem, size = 0x4000, scoped, tag = 'scratch operand']
  %s0 = inlined_call_operand.hbm [shape: f32[64,512], index: 0, kind: input, shape index: {}]
  %s1 = inlined_call_operand.vmem [shape: s32[64,1], index: 1, kind: input, shape index: {}]
  %s2 = inlined_call_operand.vmem [shape: f32[64,1], index: 2, kind: output, shape index: {}]
  %s3 = sld [smem:[#allocation0]]
  $region53: #{tpu_custom_call.1} parent=0
    _
  %s5 = ssub.s32 1, %s3
  %s6 = scalar_select 0, %s5, %s3
  $region1: #{tpu_custom_call.1} parent=0
    #allocation5 [shape = 'u8[65536]{0}', space=vmem, size = 0x10000, scoped, tag = 'input window, operand 0']
    #allocation6 [shape = 's32[2]{0}', space=sflag, size = 0x8, scoped, tag = 'scoped memory for tpu_custom_call.1']
    %7 = vsyncpa [#allocation6], 0
    %s8 = scalar_lea.sflag [#allocation6], 1
    %9 = vsyncpa %s8, 0
    loop: start=0, step=1, limit=6
    $region2: #{tpu_custom_call.1} parent=1 // loop_pre_header
      _
    $region3: #{tpu_custom_call.1} parent=1 // loop_header
      %s11 = sphi 0, %s15
      %p12 = scmp.ge.s32.totalorder %s11, 6
      %s18 = sphi 0, %s30
      %s19 = sphi 0, %s26
      %s20 = sphi 0, %s18
      %s21 = sphi 0, %s19
      %s22 = sphi 0, %s20
      %s23 = sphi 0, %s21
      %s35 = sphi 0, %s37
      %s38 = sphi 0, %s35
      %s39 = sphi 0, %s38
      %s55 = sphi 0, %s39
      %s61 = sphi 0, %s63
      %s64 = sphi 0, %s61
      %s65 = sphi 0, %s64
      %s81 = sphi 0, %s65
      %s87 = sphi 0, %s89
      %s90 = sphi 0, %s87
      %s91 = sphi 0, %s90
      %s107 = sphi 0, %s91
    $region4: #{tpu_custom_call.1} parent=1 // loop_header_branch
      %14 = sbr.rel (%p12) target = $region8
    $region5: #{tpu_custom_call.1} parent=1 // loop_body
      %s16 = ssub.s32 %s11, 1
      %s17 = ssub.s32 %s11, 2
      %s24 = sadd.s32 1, %s19
      %p25 = scmp.ge.s32.totalorder %s24, 2
      %s26 = scalar_select %p25, 0, %s24
      %s27 = sadd.s32 1, %s18
      %s28 = scalar_select %p25, %s27, %s18
      %p29 = scmp.ge.s32.totalorder %s28, 2
      %s30 = scalar_select %p29, 0, %s28
      %s31 = ssub.s32 %s18, %s30
      %s32 = ssub.s32 %s19, %s26
      %s33 = sor.u32 %s31, %s32
      %p34 = scmp.eq.s32.totalorder %s33, 0
      %s36 = sadd.s32 %s35, 1
      %s37 = scalar_select %p34, %s35, %s36
      %p40 = pneg %p34
      %p41 = scmp.eq.s32.totalorder %s11, 3
      %p42 = por %p40, %p41
      %p43 = scmp.ne.s32.totalorder %s35, %s38
      %p44 = scmp.eq.s32.totalorder %s11, 0
      %p45 = por %p43, %p44
      %p46 = scmp.ne.s32.totalorder %s35, %s38
      %p47 = scmp.eq.s32.totalorder %s16, 3
      %p48 = por %p46, %p47
      %p49 = scmp.ne.s32.totalorder %s38, %s39
      %p50 = scmp.eq.s32.totalorder %s16, 0
      %p51 = por %p49, %p50
      %p52 = scmp.ne.s32.totalorder %s38, %s39
      %p53 = scmp.eq.s32.totalorder %s17, 3
      %p54 = por %p52, %p53
      %p56 = scmp.ne.s32.totalorder %s39, %s55
      %p57 = scmp.eq.s32.totalorder %s17, 0
      %p58 = por %p56, %p57
      %s59 = ssub.s32 %s18, %s30
      %p60 = scmp.eq.s32.totalorder %s59, 0
      %s62 = sadd.s32 %s61, 1
      %s63 = scalar_select %p60, %s61, %s62
      %p66 = pneg %p60
      %p67 = scmp.eq.s32.totalorder %s11, 3
      %p68 = por %p66, %p67
      %p69 = scmp.ne.s32.totalorder %s61, %s64
      %p70 = scmp.eq.s32.totalorder %s11, 0
      %p71 = por %p69, %p70
      %p72 = scmp.ne.s32.totalorder %s61, %s64
      %p73 = scmp.eq.s32.totalorder %s16, 3
      %p74 = por %p72, %p73
      %p75 = scmp.ne.s32.totalorder %s64, %s65
      %p76 = scmp.eq.s32.totalorder %s16, 0
      %p77 = por %p75, %p76
      %p78 = scmp.ne.s32.totalorder %s64, %s65
      %p79 = scmp.eq.s32.totalorder %s17, 3
      %p80 = por %p78, %p79
      %p82 = scmp.ne.s32.totalorder %s65, %s81
      %p83 = scmp.eq.s32.totalorder %s17, 0
      %p84 = por %p82, %p83
      %s85 = ssub.s32 %s18, %s30
      %p86 = scmp.eq.s32.totalorder %s85, 0
      %s88 = sadd.s32 %s87, 1
      %s89 = scalar_select %p86, %s87, %s88
      %p92 = pneg %p86
      %p93 = scmp.eq.s32.totalorder %s11, 3
      %p94 = por %p92, %p93
      %p95 = scmp.ne.s32.totalorder %s87, %s90
      %p96 = scmp.eq.s32.totalorder %s11, 0
      %p97 = por %p95, %p96
      %p98 = scmp.ne.s32.totalorder %s87, %s90
      %p99 = scmp.eq.s32.totalorder %s16, 3
      %p100 = por %p98, %p99
      %p101 = scmp.ne.s32.totalorder %s90, %s91
      %p102 = scmp.eq.s32.totalorder %s16, 0
      %p103 = por %p101, %p102
      %p104 = scmp.ne.s32.totalorder %s90, %s91
      %p105 = scmp.eq.s32.totalorder %s17, 3
      %p106 = por %p104, %p105
      %p108 = scmp.ne.s32.totalorder %s91, %s107
      %p109 = scmp.eq.s32.totalorder %s17, 0
      %p110 = por %p108, %p109
      %p111 = scmp.le.s32.totalorder 1, %s11
      %p112 = scmp.lt.s32.totalorder %s11, 5
      %p113 = pnand %p111, %p112
      %p114 = pneg %p113
      // Predicated region
      $region9: #{tpu_custom_call.1} parent=5 // pred_check
        _
      $region10: #{tpu_custom_call.1} parent=5 // pred_check_branch
        %116 = sbr.rel (%p113) target = $region12
      $region11: #{tpu_custom_call.1} parent=5 // pred_region
        %s117 = ssub.s32 %s11, 1
      $region12: #{tpu_custom_call.1} parent=5 // pred_fallthru
        _
      %p118 = scmp.lt.s32.totalorder %s11, 4
      // Predicated region
      $region13: #{tpu_custom_call.1} parent=5 // pred_check
        %p119 = pneg %p118
      $region14: #{tpu_custom_call.1} parent=5 // pred_check_branch
        %121 = sbr.rel (%p119) target = $region16
      $region15: #{tpu_custom_call.1} parent=5 // pred_region
        // Predicated region
        $region17: #{tpu_custom_call.1} parent=15 // pred_check
          %p122 = pneg %p45
        $region18: #{tpu_custom_call.1} parent=15 // pred_check_branch
          %124 = sbr.rel (%p122) target = $region20
        $region19: #{tpu_custom_call.1} parent=15 // pred_region
          %s125 = sand.u32 %s35, 1
          %s126 = scalar_lea.sflag [#allocation6], %s125
          %s127 = sand.u32 %s35, 1
          %s128 = smul.addr %s127, 64
          %s129 = scalar_lea.vmem [#allocation5], %s128
          %s130 = smul.u32 4, %s18
          %s131 = smul.u32 2, %s19
          %s133 = ssub.s32 1024, 1024
          %134 = vsyncadd %s126, %s133
          %s135 = smul.addr %s130, 4
          %s136 = sadd.s32 %s131, %s135
          %s137 = smul.addr %s136, 128
          %s138 = scalar_lea.hbm %s0, %s137
          %s139 = sshll.u32 %s129, 4
          %s140 = int_to_ptr.vmem [resolvable:$true] %s139
          %145 = dma.hbm_to_vmem [thread:$0]  %s138, 1024, %s140, %s126, 512, 256, 16
        $region20: #{tpu_custom_call.1} parent=15 // pred_fallthru
          _
        // Predicated region
        $region21: #{tpu_custom_call.1} parent=15 // pred_check
          %p146 = pneg %p71
        $region22: #{tpu_custom_call.1} parent=15 // pred_check_branch
          %148 = sbr.rel (%p146) target = $region24
        $region23: #{tpu_custom_call.1} parent=15 // pred_region
          %s149 = smul.u32 4, %s18
          %p150 = scmp.lt.s32.totalorder %s149, 7
          %s151 = scalar_select %p150, %s149, 7
          %s152 = smul.addr %s151, 8
          %s153 = scalar_lea.vmem %s1, %s152
          %s154 = smul.u32 4, %s18
        $region24: #{tpu_custom_call.1} parent=15 // pred_fallthru
          _
      $region16: #{tpu_custom_call.1} parent=5 // pred_fallthru
        _
      %p155 = scmp.le.s32.totalorder 1, %s11
      %p156 = scmp.lt.s32.totalorder %s11, 5
      %p157 = pnand %p155, %p156
      %p158 = pneg %p157
      // Predicated region
      $region25: #{tpu_custom_call.1} parent=5 // pred_check
        _
      $region26: #{tpu_custom_call.1} parent=5 // pred_check_branch
        %160 = sbr.rel (%p157) target = $region28
      $region27: #{tpu_custom_call.1} parent=5 // pred_region
        %s161 = ssub.s32 %s11, 1
        %s162 = sand.u32 %s38, 1
        %s163 = scalar_lea.sflag [#allocation6], %s162
        %s164 = sand.u32 %s38, 1
        %s165 = smul.addr %s164, 64
        %s166 = scalar_lea.vmem [#allocation5], %s165
        // Predicated region
        $region29: #{tpu_custom_call.1} parent=27 // pred_check
          %p167 = pneg %p51
        $region30: #{tpu_custom_call.1} parent=27 // pred_check_branch
          %169 = sbr.rel (%p167) target = $region32
        $region31: #{tpu_custom_call.1} parent=27 // pred_region
          %170 = dma.done %s163, 1024
        $region32: #{tpu_custom_call.1} parent=27 // pred_fallthru
          _
        %s171 = sand.u32 %s38, 1
        %s172 = scalar_lea.sflag [#allocation6], %s171
        %s173 = sand.u32 %s38, 1
        %s174 = smul.addr %s173, 64
        %s175 = scalar_lea.vmem [#allocation5], %s174
        %p176 = pneg %p51
        %p177 = pneg %p48
        %s178 = smul.u32 4, %s20
        %p179 = scmp.lt.s32.totalorder %s178, 7
        %s180 = scalar_select %p179, %s178, 7
        %s181 = smul.addr %s180, 8
        %s182 = scalar_lea.vmem %s1, %s181
        %p183 = pneg %p77
        %p184 = pneg %p74
        %p185 = pneg %p103
        %p186 = pneg %p100
        %s187 = smul.u32 4, %s20
        %p188 = scmp.lt.s32.totalorder %s187, 7
        %s189 = scalar_select %p188, %s187, 7
        %s190 = smul.addr %s189, 8
        %s191 = scalar_lea.vmem %s2, %s190
        %s192 = smul.u32 4, %s20
        %s193 = smul.u32 2, %s21
        %s194 = smul.u32 4, %s20
        %p195 = scmp.lt.s32.totalorder %s194, 7
        %s196 = scalar_select %p195, %s194, 7
        %s197 = smul.addr %s196, 8
        %s198 = scalar_lea.vmem %s1, %s197
        %s199 = smul.u32 4, %s20
        %s200 = smul.u32 4, %s20
        %p201 = scmp.lt.s32.totalorder %s200, 7
        %s202 = scalar_select %p201, %s200, 7
        %s203 = smul.addr %s202, 8
        %s204 = scalar_lea.vmem %s2, %s203
        %s205 = smul.u32 4, %s20
        %p206 = scmp.eq.s32.totalorder %s21, 0
        // Predicated region
        $region33: #{tpu_custom_call.1} parent=27 // pred_check
          %p207 = pneg %p206
        $region34: #{tpu_custom_call.1} parent=27 // pred_check_branch
          %209 = sbr.rel (%p207) target = $region36
        $region35: #{tpu_custom_call.1} parent=27 // pred_region
          %vm210 = vcmask 7168
          %211 = vst.msk [vmem:[#allocation2] sm:$0xff] %vm210, -inf
          %212 = vst.msk [vmem:[#allocation2 + $0x8] sm:$0xff] %vm210, -inf
          %213 = vst.msk [vmem:[#allocation2 + $0x10] sm:$0xff] %vm210, -inf
          %214 = vst.msk [vmem:[#allocation2 + $0x18] sm:$0xff] %vm210, -inf
          %215 = vst.msk [vmem:[#allocation3] sm:$0xff] %vm210, 0.0
          %216 = vst.msk [vmem:[#allocation3 + $0x8] sm:$0xff] %vm210, 0.0
          %217 = vst.msk [vmem:[#allocation3 + $0x10] sm:$0xff] %vm210, 0.0
          %218 = vst.msk [vmem:[#allocation3 + $0x18] sm:$0xff] %vm210, 0.0
          %219 = vst.msk [vmem:[#allocation4] sm:$0xff] %vm210, 0.0
          %220 = vst.msk [vmem:[#allocation4 + $0x8] sm:$0xff] %vm210, 0.0
          %221 = vst.msk [vmem:[#allocation4 + $0x10] sm:$0xff] %vm210, 0.0
          %222 = vst.msk [vmem:[#allocation4 + $0x18] sm:$0xff] %vm210, 0.0
        $region36: #{tpu_custom_call.1} parent=27 // pred_fallthru
          _
        %v223 = vld [vmem:[%s166] sm:$0xff]
        %v224 = vld [vmem:[%s166 + $0x8] sm:$0xff]
        %v225 = vld [vmem:[%s166 + $0x10] sm:$0xff]
        %v226 = vld [vmem:[%s166 + $0x18] sm:$0xff]
        %v227 = vld [vmem:[%s166 + $0x20] sm:$0xff]
        %v228 = vld [vmem:[%s166 + $0x28] sm:$0xff]
        %v229 = vld [vmem:[%s166 + $0x30] sm:$0xff]
        %v230 = vld [vmem:[%s166 + $0x38] sm:$0xff]
        %v231 = vld [vmem:[%s198] sm:$0xff]
        %v232 = vld [vmem:[%s198 + $0x8] sm:$0xff]
        %v233 = vld [vmem:[%s198 + $0x10] sm:$0xff]
        %v234 = vld [vmem:[%s198 + $0x18] sm:$0xff]
        %v235 = vmax.f32 %v223, -0.9999999
        %v236 = vmax.f32 %v224, -0.9999999
        %v237 = vmax.f32 %v225, -0.9999999
        %v238 = vmax.f32 %v226, -0.9999999
        %v239 = vmax.f32 %v227, -0.9999999
        %v240 = vmax.f32 %v228, -0.9999999
        %v241 = vmax.f32 %v229, -0.9999999
        %v242 = vmax.f32 %v230, -0.9999999
        %v243 = vmin.f32 %v235, 0.9999999
        %v244 = vmin.f32 %v236, 0.9999999
        %v245 = vmin.f32 %v237, 0.9999999
        %v246 = vmin.f32 %v238, 0.9999999
        %v247 = vmin.f32 %v239, 0.9999999
        %v248 = vmin.f32 %v240, 0.9999999
        %v249 = vmin.f32 %v241, 0.9999999
        %v250 = vmin.f32 %v242, 0.9999999
        %s251 = smul.u32 %s21, 256
        %v252 = vstv %s251
        %v253 = vsub.s32 %v231, %v252
        %v254 = vsub.s32 %v232, %v252
        %v255 = vsub.s32 %v233, %v252
        %v256 = vsub.s32 %v234, %v252
        %v257 = vlaneseq
        %v258 = vand.u32 %v257, 127
        %v259 = vadd.s32 %v258, 128
        %260 = vset.pattern.permute.xlu0 0
        %261 = vperm.xlu0 %260, %v253
        %v262 = vpop.permute.xlu0 %261
        %263 = vset.pattern.permute.xlu0 0
        %264 = vperm.xlu0 %263, %v254
        %v265 = vpop.permute.xlu0 %264
        %266 = vset.pattern.permute.xlu0 0
        %267 = vperm.xlu0 %266, %v255
        %v268 = vpop.permute.xlu0 %267
        %269 = vset.pattern.permute.xlu0 0
        %270 = vperm.xlu0 %269, %v256
        %v271 = vpop.permute.xlu0 %270
        %vm272 = vcmp.eq.s32.totalorder %v258, %v262
        %vm273 = vcmp.eq.s32.totalorder %v259, %v262
        %vm274 = vcmp.eq.s32.totalorder %v258, %v265
        %vm275 = vcmp.eq.s32.totalorder %v259, %v265
        %vm276 = vcmp.eq.s32.totalorder %v258, %v268
        %vm277 = vcmp.eq.s32.totalorder %v259, %v268
        %vm278 = vcmp.eq.s32.totalorder %v258, %v271
        %vm279 = vcmp.eq.s32.totalorder %v259, %v271
        %v280 = vsel %vm272, %v243, 0.0
        %v281 = vsel %vm273, %v244, 0.0
        %v282 = vsel %vm274, %v245, 0.0
        %v283 = vsel %vm275, %v246, 0.0
        %v284 = vsel %vm276, %v247, 0.0
        %v285 = vsel %vm277, %v248, 0.0
        %v286 = vsel %vm278, %v249, 0.0
        %v287 = vsel %vm279, %v250, 0.0
        %v288 = vadd.f32 %v280, %v281
        %289 = vadd.xlane.f32.xlu0 %v288
        %v290 = vpop.xlane.xlu0 %289
        %v291 = vadd.f32 %v282, %v283
        %292 = vadd.xlane.f32.xlu0 %v291
        %v293 = vpop.xlane.xlu0 %292
        %v294 = vadd.f32 %v284, %v285
        %295 = vadd.xlane.f32.xlu0 %v294
        %v296 = vpop.xlane.xlu0 %295
        %v297 = vadd.f32 %v286, %v287
        %298 = vadd.xlane.f32.xlu0 %v297
        %v299 = vpop.xlane.xlu0 %298
        %vm300 = vcmp.ge.s32.totalorder %v253, 0
        %vm301 = vcmp.ge.s32.totalorder %v254, 0
        %vm302 = vcmp.ge.s32.totalorder %v255, 0
        %vm303 = vcmp.ge.s32.totalorder %v256, 0
        %vm304 = vcmp.lt.s32.totalorder %v253, 256
        %vm305 = vcmp.lt.s32.totalorder %v254, 256
        %vm306 = vcmp.lt.s32.totalorder %v255, 256
        %vm307 = vcmp.lt.s32.totalorder %v256, 256
        %vm308 = vmand %vm300, %vm304
        %vm309 = vmand %vm301, %vm305
        %vm310 = vmand %vm302, %vm306
        %vm311 = vmand %vm303, %vm307
        %v312 = vsel %vm308, 1, 0
        %v313 = vsel %vm309, 1, 0
        %v314 = vsel %vm310, 1, 0
        %v315 = vsel %vm311, 1, 0
        %v316 = vcvt.s32.f32 %v312
        %v317 = vcvt.s32.f32 %v313
        %v318 = vcvt.s32.f32 %v314
        %v319 = vcvt.s32.f32 %v315
        %v320 = vmul.f32 %v290, 0.87758255
        %v321 = vmul.f32 %v293, 0.87758255
        %v322 = vmul.f32 %v296, 0.87758255
        %v323 = vmul.f32 %v299, 0.87758255
        %v324 = vmul.f32 %v290, %v290
        %v325 = vmul.f32 %v293, %v293
        %v326 = vmul.f32 %v296, %v296
        %v327 = vmul.f32 %v299, %v299
        %v328 = vsub.f32 1.0, %v324
        %v329 = vsub.f32 1.0, %v325
        %v330 = vsub.f32 1.0, %v326
        %v331 = vsub.f32 1.0, %v327
        %v332 = vmax.f32 %v328, 0.0
        %v333 = vmax.f32 %v329, 0.0
        %v334 = vmax.f32 %v330, 0.0
        %v335 = vmax.f32 %v331, 0.0
        %v336 = vrsqrt.pop %v332
        %v337 = vmul.f32 %v332, %v336
        %vm338 = vcmp.eq.f32.partialorder %v332, inf
        %v339 = vsel %vm338, %v332, %v337
        %vm340 = vcmp.eq.f32.partialorder %v332, 0.0
        %v341 = vand.u32 %v332, 2147483648
        %v342 = vsel %vm340, %v341, %v339
        %v343 = vrsqrt.pop %v333
        %v344 = vmul.f32 %v333, %v343
        %vm345 = vcmp.eq.f32.partialorder %v333, inf
        %v346 = vsel %vm345, %v333, %v344
        %vm347 = vcmp.eq.f32.partialorder %v333, 0.0
        %v348 = vand.u32 %v333, 2147483648
        %v349 = vsel %vm347, %v348, %v346
        %v350 = vrsqrt.pop %v334
        %v351 = vmul.f32 %v334, %v350
        %vm352 = vcmp.eq.f32.partialorder %v334, inf
        %v353 = vsel %vm352, %v334, %v351
        %vm354 = vcmp.eq.f32.partialorder %v334, 0.0
        %v355 = vand.u32 %v334, 2147483648
        %v356 = vsel %vm354, %v355, %v353
        %v357 = vrsqrt.pop %v335
        %v358 = vmul.f32 %v335, %v357
        %vm359 = vcmp.eq.f32.partialorder %v335, inf
        %v360 = vsel %vm359, %v335, %v358
        %vm361 = vcmp.eq.f32.partialorder %v335, 0.0
        %v362 = vand.u32 %v335, 2147483648
        %v363 = vsel %vm361, %v362, %v360
        %v364 = vmul.f32 %v342, 0.47942555
        %v365 = vmul.f32 %v349, 0.47942555
        %v366 = vmul.f32 %v356, 0.47942555
        %v367 = vmul.f32 %v363, 0.47942555
        %v368 = vsub.f32 %v320, %v364
        %v369 = vsub.f32 %v321, %v365
        %v370 = vsub.f32 %v322, %v366
        %v371 = vsub.f32 %v323, %v367
        %v372 = vmul.f32 %v368, 30.0
        %v373 = vmul.f32 %v369, 30.0
        %v374 = vmul.f32 %v370, 30.0
        %v375 = vmul.f32 %v371, 30.0
        %v376 = vmul.f32 %v243, 30.0
        %v377 = vmul.f32 %v244, 30.0
        %v378 = vmul.f32 %v245, 30.0
        %v379 = vmul.f32 %v246, 30.0
        %v380 = vmul.f32 %v247, 30.0
        %v381 = vmul.f32 %v248, 30.0
        %v382 = vmul.f32 %v249, 30.0
        %v383 = vmul.f32 %v250, 30.0
        %v384 = vsel %vm272, %v372, %v376
        %v385 = vsel %vm273, %v372, %v377
        %v386 = vsel %vm274, %v373, %v378
        %v387 = vsel %vm275, %v373, %v379
        %v388 = vsel %vm276, %v374, %v380
        %v389 = vsel %vm277, %v374, %v381
        %v390 = vsel %vm278, %v375, %v382
        %v391 = vsel %vm279, %v375, %v383
        %v392 = vld [vmem:[#allocation2] sm:$0xff]
        %v393 = vld [vmem:[#allocation2 + $0x8] sm:$0xff]
        %v394 = vld [vmem:[#allocation2 + $0x10] sm:$0xff]
        %v395 = vld [vmem:[#allocation2 + $0x18] sm:$0xff]
        %v396 = vmax.f32 %v384, %v385
        %397 = vmax.xlane.f32.xlu0 %v396
        %v398 = vpop.xlane.xlu0 %397
        %v399 = vmax.f32 %v386, %v387
        %400 = vmax.xlane.f32.xlu0 %v399
        %v401 = vpop.xlane.xlu0 %400
        %v402 = vmax.f32 %v388, %v389
        %403 = vmax.xlane.f32.xlu0 %v402
        %v404 = vpop.xlane.xlu0 %403
        %v405 = vmax.f32 %v390, %v391
        %406 = vmax.xlane.f32.xlu0 %v405
        %v407 = vpop.xlane.xlu0 %406
        %v408 = vmax.f32 %v392, %v398
        %v409 = vmax.f32 %v393, %v401
        %v410 = vmax.f32 %v394, %v404
        %v411 = vmax.f32 %v395, %v407
        %v412 = vsub.f32 %v392, %v408
        %v413 = vsub.f32 %v393, %v409
        %v414 = vsub.f32 %v394, %v410
        %v415 = vsub.f32 %v395, %v411
        %v416 = vmul.f32 %v412, 1.442695
        %v417 = vpow.pop %v416
        %v418 = vmul.f32 %v413, 1.442695
        %v419 = vpow.pop %v418
        %v420 = vmul.f32 %v414, 1.442695
        %v421 = vpow.pop %v420
        %v422 = vmul.f32 %v415, 1.442695
        %v423 = vpow.pop %v422
        %v424 = vld [vmem:[#allocation3] sm:$0xff]
        %v425 = vld [vmem:[#allocation3 + $0x8] sm:$0xff]
        %v426 = vld [vmem:[#allocation3 + $0x10] sm:$0xff]
        %v427 = vld [vmem:[#allocation3 + $0x18] sm:$0xff]
        %v428 = vmul.f32 %v417, %v424
        %v429 = vmul.f32 %v419, %v425
        %v430 = vmul.f32 %v421, %v426
        %v431 = vmul.f32 %v423, %v427
        %433 = vset.pattern.permute.xlu0 0
        %434 = vperm.xlu0 %433, %v408
        %v435 = vpop.permute.xlu0 %434
        %438 = vset.pattern.permute.xlu0 0
        %439 = vperm.xlu0 %438, %v409
        %v440 = vpop.permute.xlu0 %439
        %443 = vset.pattern.permute.xlu0 0
        %444 = vperm.xlu0 %443, %v410
        %v445 = vpop.permute.xlu0 %444
        %448 = vset.pattern.permute.xlu0 0
        %449 = vperm.xlu0 %448, %v411
        %v450 = vpop.permute.xlu0 %449
        %v452 = vsub.f32 %v384, %v435
        %v453 = vsub.f32 %v385, %v435
        %v454 = vsub.f32 %v386, %v440
        %v455 = vsub.f32 %v387, %v440
        %v456 = vsub.f32 %v388, %v445
        %v457 = vsub.f32 %v389, %v445
        %v458 = vsub.f32 %v390, %v450
        %v459 = vsub.f32 %v391, %v450
        %v460 = vmul.f32 %v452, 1.442695
        %v461 = vpow.pop %v460
        %v462 = vmul.f32 %v453, 1.442695
        %v463 = vpow.pop %v462
        %v464 = vmul.f32 %v454, 1.442695
        %v465 = vpow.pop %v464
        %v466 = vmul.f32 %v455, 1.442695
        %v467 = vpow.pop %v466
        %v468 = vmul.f32 %v456, 1.442695
        %v469 = vpow.pop %v468
        %v470 = vmul.f32 %v457, 1.442695
        %v471 = vpow.pop %v470
        %v472 = vmul.f32 %v458, 1.442695
        %v473 = vpow.pop %v472
        %v474 = vmul.f32 %v459, 1.442695
        %v475 = vpow.pop %v474
        %v476 = vadd.f32 %v461, %v463
        %477 = vadd.xlane.f32.xlu0 %v476
        %v478 = vpop.xlane.xlu0 %477
        %v479 = vadd.f32 %v465, %v467
        %480 = vadd.xlane.f32.xlu0 %v479
        %v481 = vpop.xlane.xlu0 %480
        %v482 = vadd.f32 %v469, %v471
        %483 = vadd.xlane.f32.xlu0 %v482
        %v484 = vpop.xlane.xlu0 %483
        %v485 = vadd.f32 %v473, %v475
        %486 = vadd.xlane.f32.xlu0 %v485
        %v487 = vpop.xlane.xlu0 %486
        %v488 = vadd.f32 %v428, %v478
        %v489 = vadd.f32 %v429, %v481
        %v490 = vadd.f32 %v430, %v484
        %v491 = vadd.f32 %v431, %v487
        %vm492 = vcmask 7168
        %493 = vst.msk [vmem:[#allocation3] sm:$0xff] %vm492, %v488
        %494 = vst.msk [vmem:[#allocation3 + $0x8] sm:$0xff] %vm492, %v489
        %495 = vst.msk [vmem:[#allocation3 + $0x10] sm:$0xff] %vm492, %v490
        %496 = vst.msk [vmem:[#allocation3 + $0x18] sm:$0xff] %vm492, %v491
        %497 = vst.msk [vmem:[#allocation2] sm:$0xff] %vm492, %v408
        %498 = vst.msk [vmem:[#allocation2 + $0x8] sm:$0xff] %vm492, %v409
        %499 = vst.msk [vmem:[#allocation2 + $0x10] sm:$0xff] %vm492, %v410
        %500 = vst.msk [vmem:[#allocation2 + $0x18] sm:$0xff] %vm492, %v411
        %v501 = vld [vmem:[#allocation4] sm:$0xff]
        %v502 = vld [vmem:[#allocation4 + $0x8] sm:$0xff]
        %v503 = vld [vmem:[#allocation4 + $0x10] sm:$0xff]
        %v504 = vld [vmem:[#allocation4 + $0x18] sm:$0xff]
        %v505 = vmul.f32 %v316, %v372
        %v506 = vmul.f32 %v317, %v373
        %v507 = vmul.f32 %v318, %v374
        %v508 = vmul.f32 %v319, %v375
        %v509 = vadd.f32 %v501, %v505
        %v510 = vadd.f32 %v502, %v506
        %v511 = vadd.f32 %v503, %v507
        %v512 = vadd.f32 %v504, %v508
        %513 = vst.msk [vmem:[#allocation4] sm:$0xff] %vm492, %v509
        %514 = vst.msk [vmem:[#allocation4 + $0x8] sm:$0xff] %vm492, %v510
        %515 = vst.msk [vmem:[#allocation4 + $0x10] sm:$0xff] %vm492, %v511
        %516 = vst.msk [vmem:[#allocation4 + $0x18] sm:$0xff] %vm492, %v512
        %p517 = scmp.eq.s32.totalorder %s21, 1
        // Predicated region
        $region37: #{tpu_custom_call.1} parent=27 // pred_check
          %p518 = pneg %p517
        $region38: #{tpu_custom_call.1} parent=27 // pred_check_branch
          %520 = sbr.rel (%p518) target = $region40
        $region39: #{tpu_custom_call.1} parent=27 // pred_region
          %v521 = vld [vmem:[#allocation2] sm:$0xff]
          %v522 = vld [vmem:[#allocation2 + $0x8] sm:$0xff]
          %v523 = vld [vmem:[#allocation2 + $0x10] sm:$0xff]
          %v524 = vld [vmem:[#allocation2 + $0x18] sm:$0xff]
          %v525 = vld [vmem:[#allocation3] sm:$0xff]
          %v526 = vld [vmem:[#allocation3 + $0x8] sm:$0xff]
          %v527 = vld [vmem:[#allocation3 + $0x10] sm:$0xff]
          %v528 = vld [vmem:[#allocation3 + $0x18] sm:$0xff]
          %v529 = vlog2.pop %v525
          %v530 = vmul.f32 %v529, 0.6931472
          %v531 = vlog2.pop %v526
          %v532 = vmul.f32 %v531, 0.6931472
          %v533 = vlog2.pop %v527
          %v534 = vmul.f32 %v533, 0.6931472
          %v535 = vlog2.pop %v528
          %v536 = vmul.f32 %v535, 0.6931472
          %v537 = vadd.f32 %v521, %v530
          %v538 = vadd.f32 %v522, %v532
          %v539 = vadd.f32 %v523, %v534
          %v540 = vadd.f32 %v524, %v536
          %v541 = vld [vmem:[#allocation4] sm:$0xff]
          %v542 = vld [vmem:[#allocation4 + $0x8] sm:$0xff]
          %v543 = vld [vmem:[#allocation4 + $0x10] sm:$0xff]
          %v544 = vld [vmem:[#allocation4 + $0x18] sm:$0xff]
          %v545 = vsub.f32 %v537, %v541
          %v546 = vsub.f32 %v538, %v542
          %v547 = vsub.f32 %v539, %v543
          %v548 = vsub.f32 %v540, %v544
          %549 = vst.msk [vmem:[%s204] sm:$0xff] %vm492, %v545
          %550 = vst.msk [vmem:[%s204 + $0x8] sm:$0xff] %vm492, %v546
          %551 = vst.msk [vmem:[%s204 + $0x10] sm:$0xff] %vm492, %v547
          %552 = vst.msk [vmem:[%s204 + $0x18] sm:$0xff] %vm492, %v548
        $region40: #{tpu_custom_call.1} parent=27 // pred_fallthru
          _
        %s553 = smul.u32 4, %s20
        %p554 = scmp.lt.s32.totalorder %s553, 7
        %s555 = scalar_select %p554, %s553, 7
        %s556 = smul.addr %s555, 8
        %s557 = scalar_lea.vmem %s2, %s556
        // Predicated region
        $region41: #{tpu_custom_call.1} parent=27 // pred_check
          %p558 = pneg %p100
        $region42: #{tpu_custom_call.1} parent=27 // pred_check_branch
          %560 = sbr.rel (%p558) target = $region44
        $region43: #{tpu_custom_call.1} parent=27 // pred_region
          %s561 = smul.u32 4, %s20
        $region44: #{tpu_custom_call.1} parent=27 // pred_fallthru
          _
      $region28: #{tpu_custom_call.1} parent=5 // pred_fallthru
        _
      %p562 = scmp.le.s32.totalorder 2, %s11
      // Predicated region
      $region45: #{tpu_custom_call.1} parent=5 // pred_check
        %p563 = pneg %p562
      $region46: #{tpu_custom_call.1} parent=5 // pred_check_branch
        %565 = sbr.rel (%p563) target = $region48
      $region47: #{tpu_custom_call.1} parent=5 // pred_region
        %s566 = ssub.s32 %s11, 2
        // Predicated region
        $region49: #{tpu_custom_call.1} parent=47 // pred_check
          %p567 = pneg %p106
        $region50: #{tpu_custom_call.1} parent=47 // pred_check_branch
          %569 = sbr.rel (%p567) target = $region52
        $region51: #{tpu_custom_call.1} parent=47 // pred_region
          %s570 = smul.u32 4, %s22
          %p571 = scmp.lt.s32.totalorder %s570, 7
          %s572 = scalar_select %p571, %s570, 7
          %s573 = smul.addr %s572, 8
          %s574 = scalar_lea.vmem %s2, %s573
        $region52: #{tpu_custom_call.1} parent=47 // pred_fallthru
          _
      $region48: #{tpu_custom_call.1} parent=5 // pred_fallthru
        _
    $region6: #{tpu_custom_call.1} parent=1 // loop_footer
      %s15 = sadd.s32 1, %s11
    $region7: #{tpu_custom_call.1} parent=1 // loop_footer_branch
      %10 = sbr.rel target = $region3
    $region8: #{tpu_custom_call.1} parent=1 // loop_exit
      _
    %575 = vsyncpa [#allocation6], 1
    %s576 = scalar_lea.sflag [#allocation6], 1
    %577 = vsyncpa %s576, 1

</llo_original>
